<compile_context>
chip_gen: v7x
topology: tpu7x:2x2x1
jax: 0.10.0
libtpu: 0.0.40
codegen_flags: <defaults>
</compile_context>

<pallas_src>
import jax
import jax.numpy as jnp
from jax.experimental import pallas as pl
from jax.experimental.pallas import tpu as pltpu

# ---- model hyper-parameters (mirroring the PyTorch script) -----------------
INPUT_NEURONS = 16           # train_inputs.shape[1] in the original script
NEURONS_PER_LAYER = 64       # logical hidden width
HIDDEN_WIDTH = 128           # lane-dense padded hidden width used in-kernel
OUTPUT_NEURONS = 1
HIDDEN_LAYERS = 4
DROPOUT = 0.3                # identity at inference time
MAX_TM = 1024                # batch tile (rows per grid step)


def mlp_kernel(x_ref, w0_ref, b0_ref, wh_ref, bh_ref, wo_ref, bo_ref, o_ref):
    """Fused MLP forward on one (TM, INPUT_NEURONS) batch tile."""
    # Input layer: bf16 operands, f32 accumulation; bias/ReLU in f32.
    x = x_ref[...].astype(jnp.bfloat16)
    h = jnp.dot(x, w0_ref[...], preferred_element_type=jnp.float32)
    h = jnp.maximum(h + b0_ref[...], 0.0)

    # Hidden layers (static Python loop -> fully unrolled in the kernel).
    for i in range(HIDDEN_LAYERS):
        w_i = wh_ref[i]          # (HIDDEN_WIDTH, HIDDEN_WIDTH) bf16
        b_i = bh_ref[i]          # (1, HIDDEN_WIDTH) f32
        h = jnp.dot(h.astype(jnp.bfloat16), w_i,
                    preferred_element_type=jnp.float32)
        h = jnp.maximum(h + b_i, 0.0)
        # Dropout(p=0.3) is identity in eval mode.

    # Output layer: single N=1 matmul on the MXU (cheap - cost scales with
    # M*K), avoiding an expensive per-vreg cross-lane reduction on the XLU.
    o = jnp.dot(h.astype(jnp.bfloat16), wo_ref[...],
                preferred_element_type=jnp.float32)       # (TM, 1) f32
    o_ref[...] = o + bo_ref[...]


def net_forward(x, packed_params):
    """x: (..., INPUT_NEURONS) f32 -> (batch, OUTPUT_NEURONS) f32."""
    w0, b0, wh, bh, wo_col, bo = packed_params

    # Mirror the module's x.view(-1, input_neurons).
    x = x.reshape(-1, INPUT_NEURONS)
    batch = x.shape[0]

    # Batch tile: multiple of 8 sublanes, capped at MAX_TM; pad batch to a
    # multiple of TM (zero rows pass harmlessly through the MLP).
    tm = min(MAX_TM, ((batch + 7) // 8) * 8)
    num_tiles = pl.cdiv(batch, tm)
    padded_batch = num_tiles * tm
    if padded_batch != batch:
        x = jnp.pad(x, ((0, padded_batch - batch), (0, 0)))

    out = pl.pallas_call(
        mlp_kernel,
        out_shape=jax.ShapeDtypeStruct((padded_batch, OUTPUT_NEURONS),
                                       jnp.float32),
        grid=(num_tiles,),
        in_specs=[
            # batch-tiled input (double-buffered across grid steps)
            pl.BlockSpec((tm, INPUT_NEURONS), lambda i: (i, 0)),
            # weights / biases: constant index_map -> VMEM-resident
            pl.BlockSpec((INPUT_NEURONS, HIDDEN_WIDTH), lambda i: (0, 0)),
            pl.BlockSpec((1, HIDDEN_WIDTH), lambda i: (0, 0)),
            pl.BlockSpec((HIDDEN_LAYERS, HIDDEN_WIDTH, HIDDEN_WIDTH),
                         lambda i: (0, 0, 0)),
            pl.BlockSpec((HIDDEN_LAYERS, 1, HIDDEN_WIDTH),
                         lambda i: (0, 0, 0)),
            pl.BlockSpec((HIDDEN_WIDTH, OUTPUT_NEURONS), lambda i: (0, 0)),
            pl.BlockSpec((1, OUTPUT_NEURONS), lambda i: (0, 0)),
        ],
        out_specs=pl.BlockSpec((tm, OUTPUT_NEURONS), lambda i: (i, 0)),
        compiler_params=pltpu.CompilerParams(
            dimension_semantics=("parallel",)),
    )(x, w0, b0, wh, bh, wo_col, bo)

    return out[:batch]


# ---- parameter construction -------------------------------------------------
def init_logical_params(key):
    """Deterministic init with the same logical shapes as the PyTorch module,
    stored as (in, out) = transpose of nn.Linear's (out, in) weight layout."""
    keys = jax.random.split(key, 6)

    def uniform(k, shape, fan_in):
        bound = 1.0 / jnp.sqrt(float(fan_in))
        return jax.random.uniform(k, shape, jnp.float32, -bound, bound)

    w0 = uniform(keys[0], (INPUT_NEURONS, NEURONS_PER_LAYER), INPUT_NEURONS)
    b0 = uniform(keys[1], (1, NEURONS_PER_LAYER), INPUT_NEURONS)
    wh = uniform(keys[2], (HIDDEN_LAYERS, NEURONS_PER_LAYER, NEURONS_PER_LAYER),
                 NEURONS_PER_LAYER)
    bh = uniform(keys[3], (HIDDEN_LAYERS, 1, NEURONS_PER_LAYER),
                 NEURONS_PER_LAYER)
    wo = uniform(keys[4], (NEURONS_PER_LAYER, OUTPUT_NEURONS),
                 NEURONS_PER_LAYER)
    bo = uniform(keys[5], (1, OUTPUT_NEURONS), NEURONS_PER_LAYER)
    return (w0, b0, wh, bh, wo, bo)


def pack_params(logical):
    """Zero-pad hidden width 64 -> 128 (lane-dense) and cast matmul weights to
    bf16 (f32 accumulation keeps accuracy).  Biases stay f32.  Zero-padding is
    exact: padded hidden columns stay 0 through bias+ReLU and the padded rows
    of every downstream weight are 0, so they never contribute."""
    w0, b0, wh, bh, wo, bo = logical
    pad = HIDDEN_WIDTH - NEURONS_PER_LAYER
    w0p = jnp.pad(w0, ((0, 0), (0, pad))).astype(jnp.bfloat16)
    b0p = jnp.pad(b0, ((0, 0), (0, pad)))
    whp = jnp.pad(wh, ((0, 0), (0, pad), (0, pad))).astype(jnp.bfloat16)
    bhp = jnp.pad(bh, ((0, 0), (0, 0), (0, pad)))
    wo_col = jnp.pad(wo, ((0, pad), (0, 0))).astype(jnp.bfloat16)  # (128, 1)
    return (w0p, b0p, whp, bhp, wo_col, bo)


def reference_forward(x, packed_params):
    """Pure-JAX reference with identical numerics (bf16 operands, f32 acc)."""
    w0, b0, wh, bh, wo_col, bo = packed_params
    x = x.reshape(-1, INPUT_NEURONS)
    h = jnp.dot(x.astype(jnp.bfloat16), w0, preferred_element_type=jnp.float32)
    h = jnp.maximum(h + b0, 0.0)
    for i in range(HIDDEN_LAYERS):
        h = jnp.dot(h.astype(jnp.bfloat16), wh[i],
                    preferred_element_type=jnp.float32)
        h = jnp.maximum(h + bh[i], 0.0)
    return jnp.dot(h.astype(jnp.bfloat16), wo_col,
                   preferred_element_type=jnp.float32) + bo


if __name__ == "__main__":
    key = jax.random.PRNGKey(0)
    k_x, k_p = jax.random.split(key)

    batch = 8
    # forward does x.view(-1, input_neurons); feed (batch, input_neurons)
    x = jax.random.uniform(k_x, (batch, INPUT_NEURONS), jnp.float32)

    params = pack_params(init_logical_params(k_p))

    out = net_forward(x, params)
    out = jax.block_until_ready(out)

    ref = reference_forward(x, params)
    assert out.shape == (batch, OUTPUT_NEURONS)
    assert jnp.allclose(out, ref, atol=1e-3, rtol=1e-3)

    print("KERNEL_OK")
</pallas_src>

<mosaic_0001>
module attributes {stable_mosaic.version = 11 : i64} {
  func.func @mlp_kernel(%arg0: i32, %arg1: memref<8x16xf32, #tpu.memory_space<vmem>>, %arg2: memref<16x128xbf16, #tpu.memory_space<vmem>>, %arg3: memref<1x128xf32, #tpu.memory_space<vmem>>, %arg4: memref<4x128x128xbf16, #tpu.memory_space<vmem>>, %arg5: memref<4x1x128xf32, #tpu.memory_space<vmem>>, %arg6: memref<128x1xbf16, #tpu.memory_space<vmem>>, %arg7: memref<1x1xf32, #tpu.memory_space<vmem>>, %arg8: memref<8x1xf32, #tpu.memory_space<vmem>>) attributes {dimension_semantics = [#tpu.dimension_semantics<parallel>], iteration_bounds = array<i64: 1>, scalar_prefetch = 0 : i64, scratch_operands = 0 : i64, tpu.core_type = #tpu.core_type<tc>, window_params = [{transform_indices = @transform_0, window_bounds = array<i64: 8, 16>}, {pipeline_mode = #tpu.pipeline_mode<synchronous>, transform_indices = @transform_1, window_bounds = array<i64: 16, 128>}, {pipeline_mode = #tpu.pipeline_mode<synchronous>, transform_indices = @transform_2, window_bounds = array<i64: 1, 128>}, {pipeline_mode = #tpu.pipeline_mode<synchronous>, transform_indices = @transform_3, window_bounds = array<i64: 4, 128, 128>}, {pipeline_mode = #tpu.pipeline_mode<synchronous>, transform_indices = @transform_4, window_bounds = array<i64: 4, 1, 128>}, {pipeline_mode = #tpu.pipeline_mode<synchronous>, transform_indices = @transform_5, window_bounds = array<i64: 128, 1>}, {pipeline_mode = #tpu.pipeline_mode<synchronous>, transform_indices = @transform_6, window_bounds = array<i64: 1, 1>}, {transform_indices = @transform_7, window_bounds = array<i64: 8, 1>}]} {
    %c0 = arith.constant 0 : index
    %c0_0 = arith.constant 0 : index
    %0 = vector.load %arg1[%c0, %c0_0] : memref<8x16xf32, #tpu.memory_space<vmem>>, vector<8x16xf32>
    %1 = arith.truncf %0 : vector<8x16xf32> to vector<8x16xbf16>
    %c0_1 = arith.constant 0 : index
    %c0_2 = arith.constant 0 : index
    %2 = vector.load %arg2[%c0_1, %c0_2] : memref<16x128xbf16, #tpu.memory_space<vmem>>, vector<16x128xbf16>
    %cst = arith.constant dense<0.000000e+00> : vector<8x128xf32>
    %3 = tpu.matmul %1, %2, %cst {dimension_numbers = #tpu.dot_dimension_numbers<[1], [0], [0], [1], [0, 0, 1, 1], [], []>} : vector<8x16xbf16>, vector<16x128xbf16>, vector<8x128xf32> -> vector<8x128xf32>
    %c0_3 = arith.constant 0 : index
    %c0_4 = arith.constant 0 : index
    %4 = vector.load %arg3[%c0_3, %c0_4] : memref<1x128xf32, #tpu.memory_space<vmem>>, vector<1x128xf32>
    %5 = vector.broadcast %4 : vector<1x128xf32> to vector<8x128xf32>
    %6 = arith.addf %3, %5 : vector<8x128xf32>
    %cst_5 = arith.constant 0.000000e+00 : f32
    %7 = vector.broadcast %cst_5 : f32 to vector<8x128xf32>
    %8 = arith.maximumf %6, %7 : vector<8x128xf32>
    %c0_6 = arith.constant 0 : index
    %c0_7 = arith.constant 0 : index
    %c0_8 = arith.constant 0 : index
    %9 = vector.load %arg4[%c0_6, %c0_7, %c0_8] : memref<4x128x128xbf16, #tpu.memory_space<vmem>>, vector<1x128x128xbf16>
    %10 = vector.shape_cast %9 : vector<1x128x128xbf16> to vector<128x128xbf16>
    %c0_9 = arith.constant 0 : index
    %c0_10 = arith.constant 0 : index
    %c0_11 = arith.constant 0 : index
    %11 = vector.load %arg5[%c0_9, %c0_10, %c0_11] : memref<4x1x128xf32, #tpu.memory_space<vmem>>, vector<1x1x128xf32>
    %12 = vector.shape_cast %11 : vector<1x1x128xf32> to vector<1x128xf32>
    %13 = arith.truncf %8 : vector<8x128xf32> to vector<8x128xbf16>
    %cst_12 = arith.constant dense<0.000000e+00> : vector<8x128xf32>
    %14 = tpu.matmul %13, %10, %cst_12 {dimension_numbers = #tpu.dot_dimension_numbers<[1], [0], [0], [1], [0, 0, 1, 1], [], []>} : vector<8x128xbf16>, vector<128x128xbf16>, vector<8x128xf32> -> vector<8x128xf32>
    %15 = vector.broadcast %12 : vector<1x128xf32> to vector<8x128xf32>
    %16 = arith.addf %14, %15 : vector<8x128xf32>
    %cst_13 = arith.constant 0.000000e+00 : f32
    %17 = vector.broadcast %cst_13 : f32 to vector<8x128xf32>
    %18 = arith.maximumf %16, %17 : vector<8x128xf32>
    %c1 = arith.constant 1 : index
    %c0_14 = arith.constant 0 : index
    %c0_15 = arith.constant 0 : index
    %19 = vector.load %arg4[%c1, %c0_14, %c0_15] : memref<4x128x128xbf16, #tpu.memory_space<vmem>>, vector<1x128x128xbf16>
    %20 = vector.shape_cast %19 : vector<1x128x128xbf16> to vector<128x128xbf16>
    %c1_16 = arith.constant 1 : index
    %c0_17 = arith.constant 0 : index
    %c0_18 = arith.constant 0 : index
    %21 = vector.load %arg5[%c1_16, %c0_17, %c0_18] : memref<4x1x128xf32, #tpu.memory_space<vmem>>, vector<1x1x128xf32>
    %22 = vector.shape_cast %21 : vector<1x1x128xf32> to vector<1x128xf32>
    %23 = arith.truncf %18 : vector<8x128xf32> to vector<8x128xbf16>
    %cst_19 = arith.constant dense<0.000000e+00> : vector<8x128xf32>
    %24 = tpu.matmul %23, %20, %cst_19 {dimension_numbers = #tpu.dot_dimension_numbers<[1], [0], [0], [1], [0, 0, 1, 1], [], []>} : vector<8x128xbf16>, vector<128x128xbf16>, vector<8x128xf32> -> vector<8x128xf32>
    %25 = vector.broadcast %22 : vector<1x128xf32> to vector<8x128xf32>
    %26 = arith.addf %24, %25 : vector<8x128xf32>
    %cst_20 = arith.constant 0.000000e+00 : f32
    %27 = vector.broadcast %cst_20 : f32 to vector<8x128xf32>
    %28 = arith.maximumf %26, %27 : vector<8x128xf32>
    %c2 = arith.constant 2 : index
    %c0_21 = arith.constant 0 : index
    %c0_22 = arith.constant 0 : index
    %29 = vector.load %arg4[%c2, %c0_21, %c0_22] : memref<4x128x128xbf16, #tpu.memory_space<vmem>>, vector<1x128x128xbf16>
    %30 = vector.shape_cast %29 : vector<1x128x128xbf16> to vector<128x128xbf16>
    %c2_23 = arith.constant 2 : index
    %c0_24 = arith.constant 0 : index
    %c0_25 = arith.constant 0 : index
    %31 = vector.load %arg5[%c2_23, %c0_24, %c0_25] : memref<4x1x128xf32, #tpu.memory_space<vmem>>, vector<1x1x128xf32>
    %32 = vector.shape_cast %31 : vector<1x1x128xf32> to vector<1x128xf32>
    %33 = arith.truncf %28 : vector<8x128xf32> to vector<8x128xbf16>
    %cst_26 = arith.constant dense<0.000000e+00> : vector<8x128xf32>
    %34 = tpu.matmul %33, %30, %cst_26 {dimension_numbers = #tpu.dot_dimension_numbers<[1], [0], [0], [1], [0, 0, 1, 1], [], []>} : vector<8x128xbf16>, vector<128x128xbf16>, vector<8x128xf32> -> vector<8x128xf32>
    %35 = vector.broadcast %32 : vector<1x128xf32> to vector<8x128xf32>
    %36 = arith.addf %34, %35 : vector<8x128xf32>
    %cst_27 = arith.constant 0.000000e+00 : f32
    %37 = vector.broadcast %cst_27 : f32 to vector<8x128xf32>
    %38 = arith.maximumf %36, %37 : vector<8x128xf32>
    %c3 = arith.constant 3 : index
    %c0_28 = arith.constant 0 : index
    %c0_29 = arith.constant 0 : index
    %39 = vector.load %arg4[%c3, %c0_28, %c0_29] : memref<4x128x128xbf16, #tpu.memory_space<vmem>>, vector<1x128x128xbf16>
    %40 = vector.shape_cast %39 : vector<1x128x128xbf16> to vector<128x128xbf16>
    %c3_30 = arith.constant 3 : index
    %c0_31 = arith.constant 0 : index
    %c0_32 = arith.constant 0 : index
    %41 = vector.load %arg5[%c3_30, %c0_31, %c0_32] : memref<4x1x128xf32, #tpu.memory_space<vmem>>, vector<1x1x128xf32>
    %42 = vector.shape_cast %41 : vector<1x1x128xf32> to vector<1x128xf32>
    %43 = arith.truncf %38 : vector<8x128xf32> to vector<8x128xbf16>
    %cst_33 = arith.constant dense<0.000000e+00> : vector<8x128xf32>
    %44 = tpu.matmul %43, %40, %cst_33 {dimension_numbers = #tpu.dot_dimension_numbers<[1], [0], [0], [1], [0, 0, 1, 1], [], []>} : vector<8x128xbf16>, vector<128x128xbf16>, vector<8x128xf32> -> vector<8x128xf32>
    %45 = vector.broadcast %42 : vector<1x128xf32> to vector<8x128xf32>
    %46 = arith.addf %44, %45 : vector<8x128xf32>
    %cst_34 = arith.constant 0.000000e+00 : f32
    %47 = vector.broadcast %cst_34 : f32 to vector<8x128xf32>
    %48 = arith.maximumf %46, %47 : vector<8x128xf32>
    %49 = arith.truncf %48 : vector<8x128xf32> to vector<8x128xbf16>
    %c0_35 = arith.constant 0 : index
    %c0_36 = arith.constant 0 : index
    %50 = vector.load %arg6[%c0_35, %c0_36] : memref<128x1xbf16, #tpu.memory_space<vmem>>, vector<128x1xbf16>
    %cst_37 = arith.constant dense<0.000000e+00> : vector<8x1xf32>
    %51 = tpu.matmul %49, %50, %cst_37 {dimension_numbers = #tpu.dot_dimension_numbers<[1], [0], [0], [1], [0, 0, 1, 1], [], []>} : vector<8x128xbf16>, vector<128x1xbf16>, vector<8x1xf32> -> vector<8x1xf32>
    %c0_38 = arith.constant 0 : index
    %c0_39 = arith.constant 0 : index
    %52 = vector.load %arg7[%c0_38, %c0_39] : memref<1x1xf32, #tpu.memory_space<vmem>>, vector<1x1xf32>
    %53 = vector.broadcast %52 : vector<1x1xf32> to vector<8x1xf32>
    %54 = arith.addf %51, %53 : vector<8x1xf32>
    %c0_40 = arith.constant 0 : index
    %c0_41 = arith.constant 0 : index
    %55 = vector.load %arg8[%c0_40, %c0_41] : memref<8x1xf32, #tpu.memory_space<vmem>>, vector<8x1xf32>
    tpu.vector_store %arg8[%c0_40, %c0_41], %54 {strides = array<i32>} : memref<8x1xf32, #tpu.memory_space<vmem>>, vector<8x1xf32>,
    return
  }
  func.func @transform_0(%arg0: i32) -> (i32, i32) {
    %c0_i32 = arith.constant 0 : i32
    %c0_i32_0 = arith.constant 0 : i32
    return %arg0, %c0_i32 : i32, i32
  }
  func.func @transform_1(%arg0: i32) -> (i32, i32) {
    %c0_i32 = arith.constant 0 : i32
    %c0_i32_0 = arith.constant 0 : i32
    %c0_i32_1 = arith.constant 0 : i32
    return %c0_i32, %c0_i32_0 : i32, i32
  }
  func.func @transform_2(%arg0: i32) -> (i32, i32) {
    %c0_i32 = arith.constant 0 : i32
    %c0_i32_0 = arith.constant 0 : i32
    %c0_i32_1 = arith.constant 0 : i32
    return %c0_i32, %c0_i32_0 : i32, i32
  }
  func.func @transform_3(%arg0: i32) -> (i32, i32, i32) {
    %c0_i32 = arith.constant 0 : i32
    %c0_i32_0 = arith.constant 0 : i32
    %c0_i32_1 = arith.constant 0 : i32
    %c0_i32_2 = arith.constant 0 : i32
    return %c0_i32, %c0_i32_0, %c0_i32_1 : i32, i32, i32
  }
  func.func @transform_4(%arg0: i32) -> (i32, i32, i32) {
    %c0_i32 = arith.constant 0 : i32
    %c0_i32_0 = arith.constant 0 : i32
    %c0_i32_1 = arith.constant 0 : i32
    %c0_i32_2 = arith.constant 0 : i32
    return %c0_i32, %c0_i32_0, %c0_i32_1 : i32, i32, i32
  }
  func.func @transform_5(%arg0: i32) -> (i32, i32) {
    %c0_i32 = arith.constant 0 : i32
    %c0_i32_0 = arith.constant 0 : i32
    %c0_i32_1 = arith.constant 0 : i32
    return %c0_i32, %c0_i32_0 : i32, i32
  }
  func.func @transform_6(%arg0: i32) -> (i32, i32) {
    %c0_i32 = arith.constant 0 : i32
    %c0_i32_0 = arith.constant 0 : i32
    %c0_i32_1 = arith.constant 0 : i32
    return %c0_i32, %c0_i32_0 : i32, i32
  }
  func.func @transform_7(%arg0: i32) -> (i32, i32) {
    %c0_i32 = arith.constant 0 : i32
    %c0_i32_0 = arith.constant 0 : i32
    return %arg0, %c0_i32 : i32, i32
  }
}

</mosaic_0001>

<llo_original>
// kernel: tpu_custom_call.1
$region0: #{tpu_custom_call.1}
  #allocation0 [shape = 'u32[]', space=smem, size = 0x4, offset = 0x4, fixed_abs, tag = 'smem constant byte address 0x4 - core index']
  #allocation1 [shape = 'u32[144,128]{1,0:T(1,128)}', space=vmem, size = 0x12000, scoped, tag = 'internal scratch']
  #allocation2 [shape = 'f32[1,1]{1,0:T(1,128)S(1)}', space=vmem, size = 0x200, scoped, tag = 'scoped memory for tpu_custom_call.1']
  %s0 = inlined_call_operand.vmem [shape: f32[8,16], index: 0, kind: input, shape index: {}]
  %s1 = inlined_call_operand.vmem [shape: bf16[16,128], index: 1, kind: input, shape index: {}]
  %s2 = inlined_call_operand.vmem [shape: f32[1,128], index: 2, kind: input, shape index: {}]
  %s3 = inlined_call_operand.hbm [shape: bf16[4,128,128], index: 3, kind: input, shape index: {}]
  %s4 = inlined_call_operand.vmem [shape: f32[4,1,128], index: 4, kind: input, shape index: {}]
  %s5 = inlined_call_operand.vmem [shape: bf16[128,1], index: 5, kind: input, shape index: {}]
  %s6 = inlined_call_operand.<no memory space> [shape: f32[1,1], index: 6, kind: input, shape index: {}]
  %s7 = inlined_call_operand.vmem [shape: f32[8,1], index: 7, kind: output, shape index: {}]
  %s8 = sld [smem:[#allocation0]]
  $region42: #{tpu_custom_call.1} parent=0
    _
  %s10 = ssub.s32 1, %s8
  %s11 = scalar_select 0, %s10, %s8
  %v12 = vstv %s6
  %13 = vst [vmem:[#allocation2] sm:$0x1] %v12
  $region1: #{tpu_custom_call.1} parent=0
    #allocation3 [shape = 'u8[131072]{0}', space=vmem, size = 0x20000, scoped, tag = 'input window, operand 3, single buffered']
    #allocation4 [shape = 's32[1]{0}', space=sflag, size = 0x4, scoped, tag = 'scoped memory for tpu_custom_call.1']
    %14 = vsyncpa [#allocation4], 0
    // Predicated region
    $region2: #{tpu_custom_call.1} parent=1 // pred_check
      _
    $region3: #{tpu_custom_call.1} parent=1 // pred_check_branch
      %16 = sbr.rel (0) target = $region5
    $region4: #{tpu_custom_call.1} parent=1 // pred_region
      _
    $region5: #{tpu_custom_call.1} parent=1 // pred_fallthru
      _
    // Predicated region
    $region6: #{tpu_custom_call.1} parent=1 // pred_check
      _
    $region7: #{tpu_custom_call.1} parent=1 // pred_check_branch
      %18 = sbr.rel (0) target = $region9
    $region8: #{tpu_custom_call.1} parent=1 // pred_region
      _
    $region9: #{tpu_custom_call.1} parent=1 // pred_fallthru
      _
    // Predicated region
    $region10: #{tpu_custom_call.1} parent=1 // pred_check
      _
    $region11: #{tpu_custom_call.1} parent=1 // pred_check_branch
      %20 = sbr.rel (0) target = $region13
    $region12: #{tpu_custom_call.1} parent=1 // pred_region
      _
    $region13: #{tpu_custom_call.1} parent=1 // pred_fallthru
      _
    // Predicated region
    $region14: #{tpu_custom_call.1} parent=1 // pred_check
      _
    $region15: #{tpu_custom_call.1} parent=1 // pred_check_branch
      %22 = sbr.rel (0) target = $region17
    $region16: #{tpu_custom_call.1} parent=1 // pred_region
      %s24 = ssub.s32 4096, 4096
      %25 = vsyncadd [#allocation4], %s24
      %s26 = sshll.u32 [#allocation3], 4
      %s27 = int_to_ptr.vmem [resolvable:$true] %s26
      %32 = dma.hbm_to_vmem [thread:$0]  %s3, 4096, %s27, [#allocation4], 64, 64, 4
    $region17: #{tpu_custom_call.1} parent=1 // pred_fallthru
      _
    // Predicated region
    $region18: #{tpu_custom_call.1} parent=1 // pred_check
      _
    $region19: #{tpu_custom_call.1} parent=1 // pred_check_branch
      %34 = sbr.rel (0) target = $region21
    $region20: #{tpu_custom_call.1} parent=1 // pred_region
      _
    $region21: #{tpu_custom_call.1} parent=1 // pred_fallthru
      _
    // Predicated region
    $region22: #{tpu_custom_call.1} parent=1 // pred_check
      _
    $region23: #{tpu_custom_call.1} parent=1 // pred_check_branch
      %36 = sbr.rel (0) target = $region25
    $region24: #{tpu_custom_call.1} parent=1 // pred_region
      _
    $region25: #{tpu_custom_call.1} parent=1 // pred_fallthru
      _
    // Predicated region
    $region26: #{tpu_custom_call.1} parent=1 // pred_check
      _
    $region27: #{tpu_custom_call.1} parent=1 // pred_check_branch
      %38 = sbr.rel (0) target = $region29
    $region28: #{tpu_custom_call.1} parent=1 // pred_region
      _
    $region29: #{tpu_custom_call.1} parent=1 // pred_fallthru
      _
    // Predicated region
    $region30: #{tpu_custom_call.1} parent=1 // pred_check
      _
    $region31: #{tpu_custom_call.1} parent=1 // pred_check_branch
      %40 = sbr.rel (0) target = $region33
    $region32: #{tpu_custom_call.1} parent=1 // pred_region
      %41 = dma.done [#allocation4], 4096
    $region33: #{tpu_custom_call.1} parent=1 // pred_fallthru
      _
    %v43 = vld [vmem:[%s0] sm:$0xff]
    %v44 = vpack.c.bf16 %v43, %v43
    %v45 = vld [vmem:[%s1] sm:$0xf]
    %v46 = vld [vmem:[%s1 + $0x4] sm:$0xf]
    %v47 = vld [vmem:[%s2] sm:$0x1]
    %v49 = vlaneseq
    %v50 = vshrl.u32 %v49, 7
    %v51 = vsub.s32 0, %v50
    %v52 = vrot.slane %v47, %v51
    %v56 = vunpack.c.l.b16 %v45
    %v57 = vunpack.c.l.b16 %v46
    %v58 = vpack.c.b16 %v57, %v56
    %vm60 = vcmask 130048
    %v62 = vsel %vm60, %v44, 0
    %64 = vmatprep.subr.bf16.mxu0 0
    %65 = vmatpush1.bf16.msra.mxu0 %v58
    %66 = vmatprep.subr.bf16.mxu0 0
    %67 = vmatpush1.bf16.msra.mxu0 0
    %68 = vmatprep.subr.bf16.mxu0 0
    %69 = vmatpush1.bf16.msra.mxu0 0
    %70 = vmatprep.subr.bf16.mxu0 0
    %71 = vmatpush1.bf16.msra.mxu0 0
    %72 = vmatprep.subr.bf16.mxu0 0
    %73 = vmatpush1.bf16.msra.mxu0 0
    %74 = vmatprep.subr.bf16.mxu0 0
    %75 = vmatpush1.bf16.msra.mxu0 0
    %76 = vmatprep.subr.bf16.mxu0 0
    %77 = vmatpush1.bf16.msra.mxu0 0
    %78 = vmatprep.subr.bf16.mxu0 0
    %79 = vmatpush1.bf16.msra.mxu0 0
    %80 = vmatprep.subr.bf16.mxu0 0
    %81 = vmatpush1.bf16.msra.mxu0 0
    %82 = vmatprep.subr.bf16.mxu0 0
    %83 = vmatpush1.bf16.msra.mxu0 0
    %84 = vmatprep.subr.bf16.mxu0 0
    %85 = vmatpush1.bf16.msra.mxu0 0
    %86 = vmatprep.subr.bf16.mxu0 0
    %87 = vmatpush1.bf16.msra.mxu0 0
    %88 = vmatprep.subr.bf16.mxu0 0
    %89 = vmatpush1.bf16.msra.mxu0 0
    %90 = vmatprep.subr.bf16.mxu0 0
    %91 = vmatpush1.bf16.msra.mxu0 0
    %92 = vmatprep.subr.bf16.mxu0 0
    %93 = vmatpush1.bf16.msra.mxu0 0
    %94 = vmatprep.subr.bf16.mxu0 0
    %95 = vmatpush1.bf16.msra.mxu0 0
    %96 = vmatprep.mubr.bf16.mxu0 0
    %97 = vmatmul.mubr.bf16.gmra.mrb[0].mxu0 %v62
    %v98 = vpop.f32.mrb[0].mxu0
    %v99 = vadd.f32 %v52, %v98
    %v100 = vpop.f32.mrb[0].mxu0
    %v101 = vpop.f32.mrb[0].mxu0
    %v102 = vpop.f32.mrb[0].mxu0
    %103 = vdwg.mxu0
    %v104 = vmax.f32 %v99, 0.0
    %v105 = vld [vmem:[#allocation3] sm:$0xf]
    %v106 = vld [vmem:[#allocation3 + $0x4] sm:$0xf]
    %v107 = vld [vmem:[#allocation3 + $0x8] sm:$0xf]
    %v108 = vld [vmem:[#allocation3 + $0xc] sm:$0xf]
    %v109 = vld [vmem:[#allocation3 + $0x10] sm:$0xf]
    %v110 = vld [vmem:[#allocation3 + $0x14] sm:$0xf]
    %v111 = vld [vmem:[#allocation3 + $0x18] sm:$0xf]
    %v112 = vld [vmem:[#allocation3 + $0x1c] sm:$0xf]
    %v113 = vld [vmem:[#allocation3 + $0x20] sm:$0xf]
    %v114 = vld [vmem:[#allocation3 + $0x24] sm:$0xf]
    %v115 = vld [vmem:[#allocation3 + $0x28] sm:$0xf]
    %v116 = vld [vmem:[#allocation3 + $0x2c] sm:$0xf]
    %v117 = vld [vmem:[#allocation3 + $0x30] sm:$0xf]
    %v118 = vld [vmem:[#allocation3 + $0x34] sm:$0xf]
    %v119 = vld [vmem:[#allocation3 + $0x38] sm:$0xf]
    %v120 = vld [vmem:[#allocation3 + $0x3c] sm:$0xf]
    %v121 = vld [vmem:[%s4] sm:$0x1]
    %v122 = vpack.c.bf16 %v104, %v104
    %v124 = vlaneseq
    %v125 = vshrl.u32 %v124, 7
    %v126 = vsub.s32 0, %v125
    %v127 = vrot.slane %v121, %v126
    %v145 = vunpack.c.l.b16 %v105
    %v146 = vunpack.c.l.b16 %v106
    %v147 = vunpack.c.l.b16 %v107
    %v148 = vunpack.c.l.b16 %v108
    %v149 = vunpack.c.l.b16 %v109
    %v150 = vunpack.c.l.b16 %v110
    %v151 = vunpack.c.l.b16 %v111
    %v152 = vunpack.c.l.b16 %v112
    %v153 = vunpack.c.l.b16 %v113
    %v154 = vunpack.c.l.b16 %v114
    %v155 = vunpack.c.l.b16 %v115
    %v156 = vunpack.c.l.b16 %v116
    %v157 = vunpack.c.l.b16 %v117
    %v158 = vunpack.c.l.b16 %v118
    %v159 = vunpack.c.l.b16 %v119
    %v160 = vunpack.c.l.b16 %v120
    %v161 = vpack.c.b16 %v146, %v145
    %v162 = vpack.c.b16 %v148, %v147
    %v163 = vpack.c.b16 %v150, %v149
    %v164 = vpack.c.b16 %v152, %v151
    %v165 = vpack.c.b16 %v154, %v153
    %v166 = vpack.c.b16 %v156, %v155
    %v167 = vpack.c.b16 %v158, %v157
    %v168 = vpack.c.b16 %v160, %v159
    %177 = vmatprep.subr.bf16.mxu0 0
    %178 = vmatpush1.bf16.msra.mxu0 %v161
    %179 = vmatprep.subr.bf16.mxu0 0
    %180 = vmatpush1.bf16.msra.mxu0 %v162
    %181 = vmatprep.subr.bf16.mxu0 0
    %182 = vmatpush1.bf16.msra.mxu0 %v163
    %183 = vmatprep.subr.bf16.mxu0 0
    %184 = vmatpush1.bf16.msra.mxu0 %v164
    %185 = vmatprep.subr.bf16.mxu0 0
    %186 = vmatpush1.bf16.msra.mxu0 %v165
    %187 = vmatprep.subr.bf16.mxu0 0
    %188 = vmatpush1.bf16.msra.mxu0 %v166
    %189 = vmatprep.subr.bf16.mxu0 0
    %190 = vmatpush1.bf16.msra.mxu0 %v167
    %191 = vmatprep.subr.bf16.mxu0 0
    %192 = vmatpush1.bf16.msra.mxu0 %v168
    %193 = vmatprep.subr.bf16.mxu0 0
    %194 = vmatpush1.bf16.msra.mxu0 0
    %195 = vmatprep.subr.bf16.mxu0 0
    %196 = vmatpush1.bf16.msra.mxu0 0
    %197 = vmatprep.subr.bf16.mxu0 0
    %198 = vmatpush1.bf16.msra.mxu0 0
    %199 = vmatprep.subr.bf16.mxu0 0
    %200 = vmatpush1.bf16.msra.mxu0 0
    %201 = vmatprep.subr.bf16.mxu0 0
    %202 = vmatpush1.bf16.msra.mxu0 0
    %203 = vmatprep.subr.bf16.mxu0 0
    %204 = vmatpush1.bf16.msra.mxu0 0
    %205 = vmatprep.subr.bf16.mxu0 0
    %206 = vmatpush1.bf16.msra.mxu0 0
    %207 = vmatprep.subr.bf16.mxu0 0
    %208 = vmatpush1.bf16.msra.mxu0 0
    %209 = vmatprep.mubr.bf16.mxu0 0
    %210 = vmatmul.mubr.bf16.gmra.mrb[0].mxu0 %v122
    %v211 = vpop.f32.mrb[0].mxu0
    %v212 = vadd.f32 %v127, %v211
    %v213 = vpop.f32.mrb[0].mxu0
    %v214 = vpop.f32.mrb[0].mxu0
    %v215 = vpop.f32.mrb[0].mxu0
    %216 = vdwg.mxu0
    %v217 = vmax.f32 %v212, 0.0
    %s218 = scalar_lea.vmem [#allocation3], 64
    %v219 = vld [vmem:[%s218] sm:$0xf]
    %v220 = vld [vmem:[%s218 + $0x4] sm:$0xf]
    %v221 = vld [vmem:[%s218 + $0x8] sm:$0xf]
    %v222 = vld [vmem:[%s218 + $0xc] sm:$0xf]
    %v223 = vld [vmem:[%s218 + $0x10] sm:$0xf]
    %v224 = vld [vmem:[%s218 + $0x14] sm:$0xf]
    %v225 = vld [vmem:[%s218 + $0x18] sm:$0xf]
    %v226 = vld [vmem:[%s218 + $0x1c] sm:$0xf]
    %v227 = vld [vmem:[%s218 + $0x20] sm:$0xf]
    %v228 = vld [vmem:[%s218 + $0x24] sm:$0xf]
    %v229 = vld [vmem:[%s218 + $0x28] sm:$0xf]
    %v230 = vld [vmem:[%s218 + $0x2c] sm:$0xf]
    %v231 = vld [vmem:[%s218 + $0x30] sm:$0xf]
    %v232 = vld [vmem:[%s218 + $0x34] sm:$0xf]
    %v233 = vld [vmem:[%s218 + $0x38] sm:$0xf]
    %v234 = vld [vmem:[%s218 + $0x3c] sm:$0xf]
    %s235 = scalar_lea.vmem %s4, 1
    %v236 = vld [vmem:[%s235] sm:$0x1]
    %v237 = vpack.c.bf16 %v217, %v217
    %v239 = vlaneseq
    %v240 = vshrl.u32 %v239, 7
    %v241 = vsub.s32 0, %v240
    %v242 = vrot.slane %v236, %v241
    %v260 = vunpack.c.l.b16 %v219
    %v261 = vunpack.c.l.b16 %v220
    %v262 = vunpack.c.l.b16 %v221
    %v263 = vunpack.c.l.b16 %v222
    %v264 = vunpack.c.l.b16 %v223
    %v265 = vunpack.c.l.b16 %v224
    %v266 = vunpack.c.l.b16 %v225
    %v267 = vunpack.c.l.b16 %v226
    %v268 = vunpack.c.l.b16 %v227
    %v269 = vunpack.c.l.b16 %v228
    %v270 = vunpack.c.l.b16 %v229
    %v271 = vunpack.c.l.b16 %v230
    %v272 = vunpack.c.l.b16 %v231
    %v273 = vunpack.c.l.b16 %v232
    %v274 = vunpack.c.l.b16 %v233
    %v275 = vunpack.c.l.b16 %v234
    %v276 = vpack.c.b16 %v261, %v260
    %v277 = vpack.c.b16 %v263, %v262
    %v278 = vpack.c.b16 %v265, %v264
    %v279 = vpack.c.b16 %v267, %v266
    %v280 = vpack.c.b16 %v269, %v268
    %v281 = vpack.c.b16 %v271, %v270
    %v282 = vpack.c.b16 %v273, %v272
    %v283 = vpack.c.b16 %v275, %v274
    %292 = vmatprep.subr.bf16.mxu0 0
    %293 = vmatpush1.bf16.msra.mxu0 %v276
    %294 = vmatprep.subr.bf16.mxu0 0
    %295 = vmatpush1.bf16.msra.mxu0 %v277
    %296 = vmatprep.subr.bf16.mxu0 0
    %297 = vmatpush1.bf16.msra.mxu0 %v278
    %298 = vmatprep.subr.bf16.mxu0 0
    %299 = vmatpush1.bf16.msra.mxu0 %v279
    %300 = vmatprep.subr.bf16.mxu0 0
    %301 = vmatpush1.bf16.msra.mxu0 %v280
    %302 = vmatprep.subr.bf16.mxu0 0
    %303 = vmatpush1.bf16.msra.mxu0 %v281
    %304 = vmatprep.subr.bf16.mxu0 0
    %305 = vmatpush1.bf16.msra.mxu0 %v282
    %306 = vmatprep.subr.bf16.mxu0 0
    %307 = vmatpush1.bf16.msra.mxu0 %v283
    %308 = vmatprep.subr.bf16.mxu0 0
    %309 = vmatpush1.bf16.msra.mxu0 0
    %310 = vmatprep.subr.bf16.mxu0 0
    %311 = vmatpush1.bf16.msra.mxu0 0
    %312 = vmatprep.subr.bf16.mxu0 0
    %313 = vmatpush1.bf16.msra.mxu0 0
    %314 = vmatprep.subr.bf16.mxu0 0
    %315 = vmatpush1.bf16.msra.mxu0 0
    %316 = vmatprep.subr.bf16.mxu0 0
    %317 = vmatpush1.bf16.msra.mxu0 0
    %318 = vmatprep.subr.bf16.mxu0 0
    %319 = vmatpush1.bf16.msra.mxu0 0
    %320 = vmatprep.subr.bf16.mxu0 0
    %321 = vmatpush1.bf16.msra.mxu0 0
    %322 = vmatprep.subr.bf16.mxu0 0
    %323 = vmatpush1.bf16.msra.mxu0 0
    %324 = vmatprep.mubr.bf16.mxu0 0
    %325 = vmatmul.mubr.bf16.gmra.mrb[0].mxu0 %v237
    %v326 = vpop.f32.mrb[0].mxu0
    %v327 = vadd.f32 %v242, %v326
    %v328 = vpop.f32.mrb[0].mxu0
    %v329 = vpop.f32.mrb[0].mxu0
    %v330 = vpop.f32.mrb[0].mxu0
    %331 = vdwg.mxu0
    %v332 = vmax.f32 %v327, 0.0
    %s333 = scalar_lea.vmem [#allocation3], 128
    %v334 = vld [vmem:[%s333] sm:$0xf]
    %v335 = vld [vmem:[%s333 + $0x4] sm:$0xf]
    %v336 = vld [vmem:[%s333 + $0x8] sm:$0xf]
    %v337 = vld [vmem:[%s333 + $0xc] sm:$0xf]
    %v338 = vld [vmem:[%s333 + $0x10] sm:$0xf]
    %v339 = vld [vmem:[%s333 + $0x14] sm:$0xf]
    %v340 = vld [vmem:[%s333 + $0x18] sm:$0xf]
    %v341 = vld [vmem:[%s333 + $0x1c] sm:$0xf]
    %v342 = vld [vmem:[%s333 + $0x20] sm:$0xf]
    %v343 = vld [vmem:[%s333 + $0x24] sm:$0xf]
    %v344 = vld [vmem:[%s333 + $0x28] sm:$0xf]
    %v345 = vld [vmem:[%s333 + $0x2c] sm:$0xf]
    %v346 = vld [vmem:[%s333 + $0x30] sm:$0xf]
    %v347 = vld [vmem:[%s333 + $0x34] sm:$0xf]
    %v348 = vld [vmem:[%s333 + $0x38] sm:$0xf]
    %v349 = vld [vmem:[%s333 + $0x3c] sm:$0xf]
    %s350 = scalar_lea.vmem %s4, 2
    %v351 = vld [vmem:[%s350] sm:$0x1]
    %v352 = vpack.c.bf16 %v332, %v332
    %v354 = vlaneseq
    %v355 = vshrl.u32 %v354, 7
    %v356 = vsub.s32 0, %v355
    %v357 = vrot.slane %v351, %v356
    %v375 = vunpack.c.l.b16 %v334
    %v376 = vunpack.c.l.b16 %v335
    %v377 = vunpack.c.l.b16 %v336
    %v378 = vunpack.c.l.b16 %v337
    %v379 = vunpack.c.l.b16 %v338
    %v380 = vunpack.c.l.b16 %v339
    %v381 = vunpack.c.l.b16 %v340
    %v382 = vunpack.c.l.b16 %v341
    %v383 = vunpack.c.l.b16 %v342
    %v384 = vunpack.c.l.b16 %v343
    %v385 = vunpack.c.l.b16 %v344
    %v386 = vunpack.c.l.b16 %v345
    %v387 = vunpack.c.l.b16 %v346
    %v388 = vunpack.c.l.b16 %v347
    %v389 = vunpack.c.l.b16 %v348
    %v390 = vunpack.c.l.b16 %v349
    %v391 = vpack.c.b16 %v376, %v375
    %v392 = vpack.c.b16 %v378, %v377
    %v393 = vpack.c.b16 %v380, %v379
    %v394 = vpack.c.b16 %v382, %v381
    %v395 = vpack.c.b16 %v384, %v383
    %v396 = vpack.c.b16 %v386, %v385
    %v397 = vpack.c.b16 %v388, %v387
    %v398 = vpack.c.b16 %v390, %v389
    %407 = vmatprep.subr.bf16.mxu0 0
    %408 = vmatpush1.bf16.msra.mxu0 %v391
    %409 = vmatprep.subr.bf16.mxu0 0
    %410 = vmatpush1.bf16.msra.mxu0 %v392
    %411 = vmatprep.subr.bf16.mxu0 0
    %412 = vmatpush1.bf16.msra.mxu0 %v393
    %413 = vmatprep.subr.bf16.mxu0 0
    %414 = vmatpush1.bf16.msra.mxu0 %v394
    %415 = vmatprep.subr.bf16.mxu0 0
    %416 = vmatpush1.bf16.msra.mxu0 %v395
    %417 = vmatprep.subr.bf16.mxu0 0
    %418 = vmatpush1.bf16.msra.mxu0 %v396
    %419 = vmatprep.subr.bf16.mxu0 0
    %420 = vmatpush1.bf16.msra.mxu0 %v397
    %421 = vmatprep.subr.bf16.mxu0 0
    %422 = vmatpush1.bf16.msra.mxu0 %v398
    %423 = vmatprep.subr.bf16.mxu0 0
    %424 = vmatpush1.bf16.msra.mxu0 0
    %425 = vmatprep.subr.bf16.mxu0 0
    %426 = vmatpush1.bf16.msra.mxu0 0
    %427 = vmatprep.subr.bf16.mxu0 0
    %428 = vmatpush1.bf16.msra.mxu0 0
    %429 = vmatprep.subr.bf16.mxu0 0
    %430 = vmatpush1.bf16.msra.mxu0 0
    %431 = vmatprep.subr.bf16.mxu0 0
    %432 = vmatpush1.bf16.msra.mxu0 0
    %433 = vmatprep.subr.bf16.mxu0 0
    %434 = vmatpush1.bf16.msra.mxu0 0
    %435 = vmatprep.subr.bf16.mxu0 0
    %436 = vmatpush1.bf16.msra.mxu0 0
    %437 = vmatprep.subr.bf16.mxu0 0
    %438 = vmatpush1.bf16.msra.mxu0 0
    %439 = vmatprep.mubr.bf16.mxu0 0
    %440 = vmatmul.mubr.bf16.gmra.mrb[0].mxu0 %v352
    %v441 = vpop.f32.mrb[0].mxu0
    %v442 = vadd.f32 %v357, %v441
    %v443 = vpop.f32.mrb[0].mxu0
    %v444 = vpop.f32.mrb[0].mxu0
    %v445 = vpop.f32.mrb[0].mxu0
    %446 = vdwg.mxu0
    %v447 = vmax.f32 %v442, 0.0
    %s448 = scalar_lea.vmem [#allocation3], 192
    %v449 = vld [vmem:[%s448] sm:$0xf]
    %v450 = vld [vmem:[%s448 + $0x4] sm:$0xf]
    %v451 = vld [vmem:[%s448 + $0x8] sm:$0xf]
    %v452 = vld [vmem:[%s448 + $0xc] sm:$0xf]
    %v453 = vld [vmem:[%s448 + $0x10] sm:$0xf]
    %v454 = vld [vmem:[%s448 + $0x14] sm:$0xf]
    %v455 = vld [vmem:[%s448 + $0x18] sm:$0xf]
    %v456 = vld [vmem:[%s448 + $0x1c] sm:$0xf]
    %v457 = vld [vmem:[%s448 + $0x20] sm:$0xf]
    %v458 = vld [vmem:[%s448 + $0x24] sm:$0xf]
    %v459 = vld [vmem:[%s448 + $0x28] sm:$0xf]
    %v460 = vld [vmem:[%s448 + $0x2c] sm:$0xf]
    %v461 = vld [vmem:[%s448 + $0x30] sm:$0xf]
    %v462 = vld [vmem:[%s448 + $0x34] sm:$0xf]
    %v463 = vld [vmem:[%s448 + $0x38] sm:$0xf]
    %v464 = vld [vmem:[%s448 + $0x3c] sm:$0xf]
    %s465 = scalar_lea.vmem %s4, 3
    %v466 = vld [vmem:[%s465] sm:$0x1]
    %v467 = vpack.c.bf16 %v447, %v447
    %v469 = vlaneseq
    %v470 = vshrl.u32 %v469, 7
    %v471 = vsub.s32 0, %v470
    %v472 = vrot.slane %v466, %v471
    %v490 = vunpack.c.l.b16 %v449
    %v491 = vunpack.c.l.b16 %v450
    %v492 = vunpack.c.l.b16 %v451
    %v493 = vunpack.c.l.b16 %v452
    %v494 = vunpack.c.l.b16 %v453
    %v495 = vunpack.c.l.b16 %v454
    %v496 = vunpack.c.l.b16 %v455
    %v497 = vunpack.c.l.b16 %v456
    %v498 = vunpack.c.l.b16 %v457
    %v499 = vunpack.c.l.b16 %v458
    %v500 = vunpack.c.l.b16 %v459
    %v501 = vunpack.c.l.b16 %v460
    %v502 = vunpack.c.l.b16 %v461
    %v503 = vunpack.c.l.b16 %v462
    %v504 = vunpack.c.l.b16 %v463
    %v505 = vunpack.c.l.b16 %v464
    %v506 = vpack.c.b16 %v491, %v490
    %v507 = vpack.c.b16 %v493, %v492
    %v508 = vpack.c.b16 %v495, %v494
    %v509 = vpack.c.b16 %v497, %v496
    %v510 = vpack.c.b16 %v499, %v498
    %v511 = vpack.c.b16 %v501, %v500
    %v512 = vpack.c.b16 %v503, %v502
    %v513 = vpack.c.b16 %v505, %v504
    %522 = vmatprep.subr.bf16.mxu0 0
    %523 = vmatpush1.bf16.msra.mxu0 %v506
    %524 = vmatprep.subr.bf16.mxu0 0
    %525 = vmatpush1.bf16.msra.mxu0 %v507
    %526 = vmatprep.subr.bf16.mxu0 0
    %527 = vmatpush1.bf16.msra.mxu0 %v508
    %528 = vmatprep.subr.bf16.mxu0 0
    %529 = vmatpush1.bf16.msra.mxu0 %v509
    %530 = vmatprep.subr.bf16.mxu0 0
    %531 = vmatpush1.bf16.msra.mxu0 %v510
    %532 = vmatprep.subr.bf16.mxu0 0
    %533 = vmatpush1.bf16.msra.mxu0 %v511
    %534 = vmatprep.subr.bf16.mxu0 0
    %535 = vmatpush1.bf16.msra.mxu0 %v512
    %536 = vmatprep.subr.bf16.mxu0 0
    %537 = vmatpush1.bf16.msra.mxu0 %v513
    %538 = vmatprep.subr.bf16.mxu0 0
    %539 = vmatpush1.bf16.msra.mxu0 0
    %540 = vmatprep.subr.bf16.mxu0 0
    %541 = vmatpush1.bf16.msra.mxu0 0
    %542 = vmatprep.subr.bf16.mxu0 0
    %543 = vmatpush1.bf16.msra.mxu0 0
    %544 = vmatprep.subr.bf16.mxu0 0
    %545 = vmatpush1.bf16.msra.mxu0 0
    %546 = vmatprep.subr.bf16.mxu0 0
    %547 = vmatpush1.bf16.msra.mxu0 0
    %548 = vmatprep.subr.bf16.mxu0 0
    %549 = vmatpush1.bf16.msra.mxu0 0
    %550 = vmatprep.subr.bf16.mxu0 0
    %551 = vmatpush1.bf16.msra.mxu0 0
    %552 = vmatprep.subr.bf16.mxu0 0
    %553 = vmatpush1.bf16.msra.mxu0 0
    %554 = vmatprep.mubr.bf16.mxu0 0
    %555 = vmatmul.mubr.bf16.gmra.mrb[0].mxu0 %v467
    %v556 = vpop.f32.mrb[0].mxu0
    %v557 = vadd.f32 %v472, %v556
    %v558 = vpop.f32.mrb[0].mxu0
    %v559 = vpop.f32.mrb[0].mxu0
    %v560 = vpop.f32.mrb[0].mxu0
    %561 = vdwg.mxu0
    %v562 = vmax.f32 %v557, 0.0
    %v563 = vpack.c.bf16 %v562, %v562
    %v564 = vld [vmem:[%s5] sm:$0xf]
    %v565 = vld [vmem:[%s5 + $0x4] sm:$0xf]
    %v566 = vld [vmem:[%s5 + $0x8] sm:$0xf]
    %v567 = vld [vmem:[%s5 + $0xc] sm:$0xf]
    %v568 = vld [vmem:[%s5 + $0x10] sm:$0xf]
    %v569 = vld [vmem:[%s5 + $0x14] sm:$0xf]
    %v570 = vld [vmem:[%s5 + $0x18] sm:$0xf]
    %v571 = vld [vmem:[%s5 + $0x1c] sm:$0xf]
    %v572 = vld [vmem:[%s5 + $0x20] sm:$0xf]
    %v573 = vld [vmem:[%s5 + $0x24] sm:$0xf]
    %v574 = vld [vmem:[%s5 + $0x28] sm:$0xf]
    %v575 = vld [vmem:[%s5 + $0x2c] sm:$0xf]
    %v576 = vld [vmem:[%s5 + $0x30] sm:$0xf]
    %v577 = vld [vmem:[%s5 + $0x34] sm:$0xf]
    %v578 = vld [vmem:[%s5 + $0x38] sm:$0xf]
    %v579 = vld [vmem:[%s5 + $0x3c] sm:$0xf]
    %v580 = vld [vmem:[#allocation2] sm:$0x1]
    %v582 = vlaneseq
    %v583 = vshrl.u32 %v582, 7
    %v584 = vsub.s32 0, %v583
    %v585 = vrot.slane %v580, %v584
    %v603 = vunpack.c.l.b16 %v564
    %v604 = vunpack.c.l.b16 %v565
    %v605 = vunpack.c.l.b16 %v566
    %v606 = vunpack.c.l.b16 %v567
    %v607 = vunpack.c.l.b16 %v568
    %v608 = vunpack.c.l.b16 %v569
    %v609 = vunpack.c.l.b16 %v570
    %v610 = vunpack.c.l.b16 %v571
    %v611 = vunpack.c.l.b16 %v572
    %v612 = vunpack.c.l.b16 %v573
    %v613 = vunpack.c.l.b16 %v574
    %v614 = vunpack.c.l.b16 %v575
    %v615 = vunpack.c.l.b16 %v576
    %v616 = vunpack.c.l.b16 %v577
    %v617 = vunpack.c.l.b16 %v578
    %v618 = vunpack.c.l.b16 %v579
    %v619 = vpack.c.b16 %v604, %v603
    %v620 = vpack.c.b16 %v606, %v605
    %v621 = vpack.c.b16 %v608, %v607
    %v622 = vpack.c.b16 %v610, %v609
    %v623 = vpack.c.b16 %v612, %v611
    %v624 = vpack.c.b16 %v614, %v613
    %v625 = vpack.c.b16 %v616, %v615
    %v626 = vpack.c.b16 %v618, %v617
    %635 = vmatprep.subr.bf16.mxu0 0
    %636 = vmatpush1.bf16.msra.mxu0 %v619
    %637 = vmatprep.subr.bf16.mxu0 0
    %638 = vmatpush1.bf16.msra.mxu0 %v620
    %639 = vmatprep.subr.bf16.mxu0 0
    %640 = vmatpush1.bf16.msra.mxu0 %v621
    %641 = vmatprep.subr.bf16.mxu0 0
    %642 = vmatpush1.bf16.msra.mxu0 %v622
    %643 = vmatprep.subr.bf16.mxu0 0
    %644 = vmatpush1.bf16.msra.mxu0 %v623
    %645 = vmatprep.subr.bf16.mxu0 0
    %646 = vmatpush1.bf16.msra.mxu0 %v624
    %647 = vmatprep.subr.bf16.mxu0 0
    %648 = vmatpush1.bf16.msra.mxu0 %v625
    %649 = vmatprep.subr.bf16.mxu0 0
    %650 = vmatpush1.bf16.msra.mxu0 %v626
    %651 = vmatprep.subr.bf16.mxu0 0
    %652 = vmatpush1.bf16.msra.mxu0 0
    %653 = vmatprep.subr.bf16.mxu0 0
    %654 = vmatpush1.bf16.msra.mxu0 0
    %655 = vmatprep.subr.bf16.mxu0 0
    %656 = vmatpush1.bf16.msra.mxu0 0
    %657 = vmatprep.subr.bf16.mxu0 0
    %658 = vmatpush1.bf16.msra.mxu0 0
    %659 = vmatprep.subr.bf16.mxu0 0
    %660 = vmatpush1.bf16.msra.mxu0 0
    %661 = vmatprep.subr.bf16.mxu0 0
    %662 = vmatpush1.bf16.msra.mxu0 0
    %663 = vmatprep.subr.bf16.mxu0 0
    %664 = vmatpush1.bf16.msra.mxu0 0
    %665 = vmatprep.subr.bf16.mxu0 0
    %666 = vmatpush1.bf16.msra.mxu0 0
    %667 = vmatprep.mubr.bf16.mxu0 0
    %668 = vmatmul.mubr.bf16.gmra.mrb[0].mxu0 %v563
    %v669 = vpop.f32.mrb[0].mxu0
    %v670 = vadd.f32 %v585, %v669
    %v671 = vpop.f32.mrb[0].mxu0
    %v672 = vpop.f32.mrb[0].mxu0
    %v673 = vpop.f32.mrb[0].mxu0
    %674 = vdwg.mxu0
    %vm675 = vcmask 7168
    %676 = vst.msk [vmem:[%s7] sm:$0xff] %vm675, %v670
    // Predicated region
    $region34: #{tpu_custom_call.1} parent=1 // pred_check
      _
    $region35: #{tpu_custom_call.1} parent=1 // pred_check_branch
      %678 = sbr.rel (0) target = $region37
    $region36: #{tpu_custom_call.1} parent=1 // pred_region
      _
    $region37: #{tpu_custom_call.1} parent=1 // pred_fallthru
      _
    // Predicated region
    $region38: #{tpu_custom_call.1} parent=1 // pred_check
      _
    $region39: #{tpu_custom_call.1} parent=1 // pred_check_branch
      %680 = sbr.rel (0) target = $region41
    $region40: #{tpu_custom_call.1} parent=1 // pred_region
      _
    $region41: #{tpu_custom_call.1} parent=1 // pred_fallthru
      _
    %681 = vsyncpa [#allocation4], 1

</llo_original>
